<compile_context>
chip_gen: v5e
topology: v5e:2x2
jax: 0.10.0
libtpu: 0.0.40
codegen_flags: <defaults>
</compile_context>

<pallas_src>
import jax
import jax.numpy as jnp
from jax import lax
from jax.experimental import pallas as pl
from jax.experimental.pallas import tpu as pltpu


def _round_up(n: int, m: int) -> int:
    return ((n + m - 1) // m) * m


def _padded_block_bytes(shape, dtype) -> int:
    """Conservative VMEM footprint of one buffered block (internal (sub,128) padding)."""
    itemsize = jnp.dtype(dtype).itemsize
    sub = max(8, 32 // itemsize)
    dims = list(shape)
    if len(dims) == 1:
        dims = [1] + dims
    dims[-1] = _round_up(dims[-1], 128)
    dims[-2] = _round_up(dims[-2], sub)
    total = 1
    for d in dims:
        total *= d
    return total * itemsize


def _make_gram_kernel(tb: int, true_b: int, tiles_per_core: int,
                      need_mask: bool, cast_bf16: bool):
    """Kernel closure; static config baked in at trace time."""

    def kernel(x_ref, mean_ref, prec_ref, out_ref, gram_ref):
        # x_ref:    (tb, D)     VMEM  -- batch tile in x's NATIVE dtype (pipelined)
        # mean_ref: (1,  D)     VMEM  -- f32, resident (constant block index)
        # prec_ref: (D,  D)     VMEM  -- f32, resident, only read in the epilogue
        # out_ref:  (1, 8, 128) VMEM  -- per-core lane-dense partial-scalar slab
        # gram_ref: (D,  D)     VMEM scratch -- per-core Gram accumulator (f32)
        c = pl.program_id(0)   # core-split axis ("parallel")
        i = pl.program_id(1)   # batch-tile axis within a core ("arbitrary")

        @pl.when(i == 0)
        def _():
            gram_ref[...] = jnp.zeros_like(gram_ref)

        # Upcast in-kernel: x streams at its native width, math/accumulation in f32.
        diff = x_ref[...].astype(jnp.float32) - mean_ref[...]          # (tb, D)

        if need_mask:
            # Zero out rows past the true batch (ragged last tile and/or the
            # fully-out-of-range padding tiles of the core split). 2D iota (TPU req).
            row0 = (c * tiles_per_core + i) * tb
            rows = lax.broadcasted_iota(jnp.int32, (tb, 1), 0) + row0
            diff = jnp.where(rows < true_b, diff, 0.0)

        # Optional bf16 operands for the MXU when D is large enough to be
        # compute-bound (v5e crossover earlier than v6e/v7x); accumulation stays f32.
        lhs = diff.astype(jnp.bfloat16) if cast_bf16 else diff

        # G += diff^T @ diff : single MXU contraction over the batch axis.
        gram_ref[...] += lax.dot_general(
            lhs, lhs,
            dimension_numbers=(((0,), (0,)), ((), ())),
            preferred_element_type=jnp.float32)                         # (D, D)

        @pl.when(i == tiles_per_core - 1)
        def _():
            # sum_b diff_b^T P diff_b == trace(P @ G) == sum(P * G)  (G symmetric).
            # Write this core's UNnormalized partial; wrapper sums partials and
            # divides by the true B ('mean') or not ('sum').
            total = jnp.sum(prec_ref[...] * gram_ref[...])
            out_ref[...] = jnp.full(out_ref.shape, total, dtype=out_ref.dtype)

    return kernel


def normal_prior(x, mean_full, precision_full, reduction="mean",
                 block_b=None, min_pallas_rows=64, bf16_gram_min_betas=256):
    """x: (B, num_betas); mean_full: (D_full,); precision_full: (D_full, D_full)."""
    if x.shape[0] < 1:
        # Matches torch: empty batch -> 0 in the input dtype.
        return jnp.zeros((), dtype=x.dtype)

    B, num_betas = x.shape
    mean = mean_full[:num_betas].astype(jnp.float32)
    prec = precision_full[:num_betas, :num_betas].astype(jnp.float32)

    if reduction == "mean":
        scale = 1.0 / B
    elif reduction == "sum":
        scale = 1.0
    else:
        # TODO(synk): reduction='none' (per-sample dist vector) not implemented in Pallas path.
        raise NotImplementedError(f"reduction={reduction!r} not supported")

    # Tiny problems: a pallas_call is pure fixed overhead; let XLA fuse it.
    if B < min_pallas_rows:
        diff = x.astype(jnp.float32) - mean[None, :]
        dist = jnp.einsum("bi,ij,bj->b", diff, prec, diff)
        return jnp.sum(dist) * jnp.float32(scale)

    # ---- batch tile: scale with D so each x DMA is ~512 KiB ----------------
    itemsize = jnp.dtype(x.dtype).itemsize
    sublane = max(8, 32 // itemsize)            # 8 (f32) / 16 (bf16) / 32 (int8)
    if block_b is None:
        tb = (512 * 1024) // max(1, itemsize * num_betas)
        tb = max(512, min(tb, 8192))
    else:
        tb = block_b
    tb = min(tb, B)
    if tb >= B:
        tb = B                                   # full-extent block: exempt from alignment
    else:
        tb = _round_up(tb, sublane)
        if tb >= B:
            tb = B

    n_tiles = pl.cdiv(B, tb)
    num_cores = 2 if n_tiles >= 2 else 1         # v7x: 2 TCs; serial (still correct) on 1-TC chips
    tiles_per_core = pl.cdiv(n_tiles, num_cores)
    need_mask = (B % tb != 0) or (num_cores * tiles_per_core != n_tiles)
    cast_bf16 = num_betas >= bf16_gram_min_betas

    mean_p = mean.reshape(1, num_betas)

    def x_index_map(c, i):
        t = c * tiles_per_core + i
        # Clamp logical tiles past the array (odd tile split); masked to zero in-kernel.
        return (jnp.minimum(t, n_tiles - 1), 0)

    # ---- shape-aware VMEM budget (double-buffered inputs + scratch + output) ----
    # TODO(synk): for very large num_betas (>~1024) emit the per-core Gram to HBM and
    # do sum(P*G) in the wrapper instead of keeping precision VMEM-resident.
    needed = (2 * _padded_block_bytes((tb, num_betas), x.dtype)
              + 2 * _padded_block_bytes((1, num_betas), jnp.float32)
              + 2 * _padded_block_bytes((num_betas, num_betas), jnp.float32)
              + _padded_block_bytes((num_betas, num_betas), jnp.float32)
              + 2 * _padded_block_bytes((1, 8, 128), jnp.float32))
    vmem_limit = int(min(max(needed + (4 << 20), 16 << 20), 64 << 20))

    kernel = _make_gram_kernel(tb, B, tiles_per_core, need_mask, cast_bf16)

    partials = pl.pallas_call(
        kernel,
        out_shape=jax.ShapeDtypeStruct((num_cores, 8, 128), jnp.float32),
        grid=(num_cores, tiles_per_core),
        in_specs=[
            # x: streamed batch tiles, native dtype, UNpadded feature dim
            # (last block dim == full array dim -> exempt from the 128 rule).
            pl.BlockSpec((tb, num_betas), x_index_map),
            # mean / precision: constant block index -> VMEM-resident, DMA'd once.
            pl.BlockSpec((1, num_betas), lambda c, i: (0, 0)),
            pl.BlockSpec((num_betas, num_betas), lambda c, i: (0, 0)),
        ],
        # Per-core lane-dense partial-scalar slab (no cross-core output sharing).
        out_specs=pl.BlockSpec((1, 8, 128), lambda c, i: (c, 0, 0)),
        scratch_shapes=[pltpu.VMEM((num_betas, num_betas), jnp.float32)],  # Gram acc (per core)
        compiler_params=pltpu.CompilerParams(
            dimension_semantics=("parallel", "arbitrary"),
            vmem_limit_bytes=vmem_limit,
        ),
    )(x, mean_p, prec)

    return jnp.sum(partials[:, 0, 0]) * jnp.float32(scale)


def make_synthetic_stats(key, d_full):
    """Deterministic synthetic 'stats_path' contents: mean + SPD covariance + pinv."""
    k_mean, k_a = jax.random.split(key)
    mean = jax.random.normal(k_mean, (d_full,), dtype=jnp.float32)
    a = jax.random.normal(k_a, (d_full, d_full), dtype=jnp.float32) * 0.1
    covariance = a @ a.T + 0.5 * jnp.eye(d_full, dtype=jnp.float32)
    precision = jnp.linalg.pinv(covariance)
    return mean, covariance, precision


def _reference(x, mean_full, prec_full):
    nb = x.shape[-1]
    diff = x.astype(jnp.float32) - mean_full[:nb][None, :]
    return jnp.mean(jnp.einsum("bi,ij,bj->b", diff, prec_full[:nb, :nb], diff))


if __name__ == "__main__":
    key = jax.random.PRNGKey(0)
    k_stats, k_x, k_x_small = jax.random.split(key, 3)

    D_FULL = 32      # dimensionality stored in the synthetic stats file
    NUM_BETAS = 16   # module_input.shape[-1] <= D_FULL
    B = 300          # not a multiple of the tile -> exercises ragged masking

    mean_full, cov_full, prec_full = make_synthetic_stats(k_stats, D_FULL)
    x = jax.random.normal(k_x, (B, NUM_BETAS), dtype=jnp.float32)
    ref = _reference(x, mean_full, prec_full)

    # --- multi-tile path: 3 batch tiles, 2-way core split, ragged last tile ---
    out = normal_prior(x, mean_full, prec_full, reduction="mean", block_b=128)
    out = jax.block_until_ready(out)
    assert jnp.allclose(out, ref, rtol=1e-4, atol=1e-4), (out, ref)

    # --- auto-tile path: single full-extent block, no masking ------------------
    out_auto = normal_prior(x, mean_full, prec_full, reduction="mean")
    out_auto = jax.block_until_ready(out_auto)
    assert jnp.allclose(out_auto, ref, rtol=1e-4, atol=1e-4), (out_auto, ref)

    # --- bf16 activations: streamed at native width, upcast in-kernel ----------
    x_bf16 = x.astype(jnp.bfloat16)
    out_bf = normal_prior(x_bf16, mean_full, prec_full, reduction="mean", block_b=128)
    out_bf = jax.block_until_ready(out_bf)
    ref_bf = _reference(x_bf16.astype(jnp.float32), mean_full, prec_full)
    assert jnp.allclose(out_bf, ref_bf, rtol=1e-3, atol=1e-3), (out_bf, ref_bf)

    # --- tiny-batch path (skips Pallas; fused XLA einsum) ----------------------
    x_small = jax.random.normal(k_x_small, (2, NUM_BETAS), dtype=jnp.float32)
    out_small = normal_prior(x_small, mean_full, prec_full, reduction="mean")
    out_small = jax.block_until_ready(out_small)
    ref_small = _reference(x_small, mean_full, prec_full)
    assert jnp.allclose(out_small, ref_small, rtol=1e-5, atol=1e-5), (out_small, ref_small)

    print("KERNEL_OK")
</pallas_src>

<mosaic_0001>
module attributes {stable_mosaic.version = 11 : i64} {
  func.func @kernel(%arg0: i32, %arg1: i32, %arg2: memref<128x16xf32, #tpu.memory_space<vmem>>, %arg3: memref<1x16xf32, #tpu.memory_space<vmem>>, %arg4: memref<16x16xf32, #tpu.memory_space<vmem>>, %arg5: memref<1x8x128xf32, #tpu.memory_space<vmem>>, %arg6: memref<16x16xf32, #tpu.memory_space<vmem>>) attributes {dimension_semantics = [#tpu.dimension_semantics<parallel>, #tpu.dimension_semantics<arbitrary>], iteration_bounds = array<i64: 2, 2>, scalar_prefetch = 0 : i64, scratch_operands = 1 : i64, tpu.core_type = #tpu.core_type<tc>, window_params = [{transform_indices = @transform_0, window_bounds = array<i64: 128, 16>}, {pipeline_mode = #tpu.pipeline_mode<synchronous>, transform_indices = @transform_1, window_bounds = array<i64: 1, 16>}, {pipeline_mode = #tpu.pipeline_mode<synchronous>, transform_indices = @transform_2, window_bounds = array<i64: 16, 16>}, {transform_indices = @transform_3, window_bounds = array<i64: 1, 8, 128>}]} {
    %c0_i32 = arith.constant 0 : i32
    %0 = arith.cmpi eq, %arg1, %c0_i32 : i32
    %1 = arith.extui %0 : i1 to i32
    %c0_i32_0 = arith.constant 0 : i32
    %2 = arith.cmpi ne, %1, %c0_i32_0 : i32
    scf.if %2 {
      %cst_10 = arith.constant 0.000000e+00 : f32
      %26 = vector.broadcast %cst_10 : f32 to vector<16x16xf32>
      %c0_11 = arith.constant 0 : index
      %c0_12 = arith.constant 0 : index
      %27 = vector.load %arg6[%c0_11, %c0_12] : memref<16x16xf32, #tpu.memory_space<vmem>>, vector<16x16xf32>
      tpu.vector_store %arg6[%c0_11, %c0_12], %26 {strides = array<i32>} : memref<16x16xf32, #tpu.memory_space<vmem>>, vector<16x16xf32>,
    } else {
    }
    %c0 = arith.constant 0 : index
    %c0_1 = arith.constant 0 : index
    %3 = vector.load %arg2[%c0, %c0_1] : memref<128x16xf32, #tpu.memory_space<vmem>>, vector<128x16xf32>
    %c0_2 = arith.constant 0 : index
    %c0_3 = arith.constant 0 : index
    %4 = vector.load %arg3[%c0_2, %c0_3] : memref<1x16xf32, #tpu.memory_space<vmem>>, vector<1x16xf32>
    %5 = vector.broadcast %4 : vector<1x16xf32> to vector<128x16xf32>
    %6 = arith.subf %3, %5 : vector<128x16xf32>
    %c2_i32 = arith.constant 2 : i32
    %7 = arith.muli %arg0, %c2_i32 : i32
    %8 = arith.addi %7, %arg1 : i32
    %c128_i32 = arith.constant 128 : i32
    %9 = arith.muli %8, %c128_i32 : i32
    %10 = tpu.iota {dimensions = array<i32: 0>} : vector<128x1xi32>
    %11 = vector.broadcast %9 : i32 to vector<128x1xi32>
    %12 = arith.addi %10, %11 : vector<128x1xi32>
    %c300_i32 = arith.constant 300 : i32
    %13 = vector.broadcast %c300_i32 : i32 to vector<128x1xi32>
    %14 = arith.cmpi slt, %12, %13 : vector<128x1xi32>
    %cst = arith.constant 0.000000e+00 : f32
    %15 = vector.shape_cast %14 : vector<128x1xi1> to vector<128x1xi1>
    %16 = vector.broadcast %15 : vector<128x1xi1> to vector<128x16xi1>
    %17 = vector.broadcast %cst : f32 to vector<128x16xf32>
    %18 = arith.select %16, %6, %17 : vector<128x16xi1>, vector<128x16xf32>
    %c0_4 = arith.constant 0 : index
    %c0_5 = arith.constant 0 : index
    %19 = vector.load %arg6[%c0_4, %c0_5] : memref<16x16xf32, #tpu.memory_space<vmem>>, vector<16x16xf32>
    %cst_6 = arith.constant dense<0.000000e+00> : vector<16x16xf32>
    %20 = tpu.matmul %18, %18, %cst_6 {dimension_numbers = #tpu.dot_dimension_numbers<[0], [0], [1], [1], [0, 1, 1, 1], [], []>} : vector<128x16xf32>, vector<128x16xf32>, vector<16x16xf32> -> vector<16x16xf32>
    %21 = arith.addf %19, %20 : vector<16x16xf32>
    %c0_7 = arith.constant 0 : index
    %c0_8 = arith.constant 0 : index
    %22 = vector.load %arg6[%c0_7, %c0_8] : memref<16x16xf32, #tpu.memory_space<vmem>>, vector<16x16xf32>
    tpu.vector_store %arg6[%c0_7, %c0_8], %21 {strides = array<i32>} : memref<16x16xf32, #tpu.memory_space<vmem>>, vector<16x16xf32>,
    %c1_i32 = arith.constant 1 : i32
    %23 = arith.cmpi eq, %arg1, %c1_i32 : i32
    %24 = arith.extui %23 : i1 to i32
    %c0_i32_9 = arith.constant 0 : i32
    %25 = arith.cmpi ne, %24, %c0_i32_9 : i32
    scf.if %25 {
      %c0_10 = arith.constant 0 : index
      %c0_11 = arith.constant 0 : index
      %26 = vector.load %arg4[%c0_10, %c0_11] : memref<16x16xf32, #tpu.memory_space<vmem>>, vector<16x16xf32>
      %c0_12 = arith.constant 0 : index
      %c0_13 = arith.constant 0 : index
      %27 = vector.load %arg6[%c0_12, %c0_13] : memref<16x16xf32, #tpu.memory_space<vmem>>, vector<16x16xf32>
      %28 = arith.mulf %26, %27 : vector<16x16xf32>
      %29 = vector.shape_cast %28 : vector<16x16xf32> to vector<1x16x16xf32>
      %cst_14 = arith.constant dense<0.000000e+00> : vector<1xf32>
      %30 = vector.multi_reduction <add>, %29, %cst_14 [1, 2] : vector<1x16x16xf32> to vector<1xf32>
      %31 = vector.shape_cast %30 : vector<1xf32> to vector<1x1x1xf32>
      %32 = vector.extract %31[0, 0, 0] : f32 from vector<1x1x1xf32>
      %33 = vector.broadcast %32 : f32 to vector<1x8x128xf32>
      %c0_15 = arith.constant 0 : index
      %c0_16 = arith.constant 0 : index
      %c0_17 = arith.constant 0 : index
      %34 = vector.load %arg5[%c0_15, %c0_16, %c0_17] : memref<1x8x128xf32, #tpu.memory_space<vmem>>, vector<1x8x128xf32>
      tpu.vector_store %arg5[%c0_15, %c0_16, %c0_17], %33 {strides = array<i32>} : memref<1x8x128xf32, #tpu.memory_space<vmem>>, vector<1x8x128xf32>,
    } else {
    }
    return
  }
  func.func @transform_0(%arg0: i32, %arg1: i32) -> (i32, i32) {
    %c2_i32 = arith.constant 2 : i32
    %0 = arith.muli %arg0, %c2_i32 : i32
    %1 = arith.addi %0, %arg1 : i32
    %c2_i32_0 = arith.constant 2 : i32
    %2 = arith.minsi %1, %c2_i32_0 : i32
    %c0_i32 = arith.constant 0 : i32
    %c0_i32_1 = arith.constant 0 : i32
    return %2, %c0_i32 : i32, i32
  }
  func.func @transform_1(%arg0: i32, %arg1: i32) -> (i32, i32) {
    %c0_i32 = arith.constant 0 : i32
    %c0_i32_0 = arith.constant 0 : i32
    %c0_i32_1 = arith.constant 0 : i32
    return %c0_i32, %c0_i32_0 : i32, i32
  }
  func.func @transform_2(%arg0: i32, %arg1: i32) -> (i32, i32) {
    %c0_i32 = arith.constant 0 : i32
    %c0_i32_0 = arith.constant 0 : i32
    %c0_i32_1 = arith.constant 0 : i32
    return %c0_i32, %c0_i32_0 : i32, i32
  }
  func.func @transform_3(%arg0: i32, %arg1: i32) -> (i32, i32, i32) {
    %c0_i32 = arith.constant 0 : i32
    %c0_i32_0 = arith.constant 0 : i32
    %c0_i32_1 = arith.constant 0 : i32
    return %arg0, %c0_i32, %c0_i32_0 : i32, i32, i32
  }
}

</mosaic_0001>

<llo_original>
// kernel: tpu_custom_call.1
$region0: #{tpu_custom_call.1}
  #allocation0 [shape = 'u32[]', space=smem, size = 0x4, offset = 0x4, fixed_abs, tag = 'smem constant byte address 0x4 - core index']
  #allocation1 [shape = 'u32[72,128]{1,0:T(1,128)}', space=vmem, size = 0x9000, scoped, tag = 'internal scratch']
  #allocation2 [shape = 'f32[16,16]{1,0:T(8,128)}', space=vmem, size = 0x2000, scoped, tag = 'scratch operand']
  %s0 = inlined_call_operand.vmem [shape: f32[300,16], index: 0, kind: input, shape index: {}]
  %s1 = inlined_call_operand.vmem [shape: f32[1,16], index: 1, kind: input, shape index: {}]
  %s2 = inlined_call_operand.vmem [shape: f32[16,16], index: 2, kind: input, shape index: {}]
  %s3 = inlined_call_operand.hbm [shape: f32[2,8,128], index: 3, kind: output, shape index: {}]
  %s4 = sld [smem:[#allocation0]]
  $region53: #{tpu_custom_call.1} parent=0
    _
  %s6 = ssub.s32 1, %s4
  %s7 = scalar_select 0, %s6, %s4
  $region1: #{tpu_custom_call.1} parent=0
    #allocation3 [shape = 'u8[8192]{0}', space=vmem, size = 0x2000, scoped, tag = 'output window, operand 0']
    #allocation4 [shape = 's32[2]{0}', space=sflag, size = 0x8, scoped, tag = 'scoped memory for tpu_custom_call.1']
    %8 = vsyncpa [#allocation4], 0
    %s9 = scalar_lea.sflag [#allocation4], 1
    %10 = vsyncpa %s9, 0
    loop: start=0, step=1, limit=6
    $region2: #{tpu_custom_call.1} parent=1 // loop_pre_header
      _
    $region3: #{tpu_custom_call.1} parent=1 // loop_header
      %s12 = sphi 0, %s16
      %p13 = scmp.ge.s32.totalorder %s12, 6
      %s19 = sphi 0, %s31
      %s20 = sphi 0, %s27
      %s21 = sphi 0, %s19
      %s22 = sphi 0, %s20
      %s23 = sphi 0, %s21
      %s24 = sphi 0, %s22
      %s42 = sphi 0, %s44
      %s45 = sphi 0, %s42
      %s46 = sphi 0, %s45
      %s62 = sphi 0, %s46
      %s66 = sphi 0, %s66
      %s68 = sphi 0, %s66
      %s69 = sphi 0, %s68
      %s83 = sphi 0, %s69
      %s87 = sphi 0, %s87
      %s89 = sphi 0, %s87
      %s90 = sphi 0, %s89
      %s104 = sphi 0, %s90
      %s110 = sphi 0, %s112
      %s113 = sphi 0, %s110
      %s114 = sphi 0, %s113
      %s130 = sphi 0, %s114
    $region4: #{tpu_custom_call.1} parent=1 // loop_header_branch
      %15 = sbr.rel (%p13) target = $region8
    $region5: #{tpu_custom_call.1} parent=1 // loop_body
      %s17 = ssub.s32 %s12, 1
      %s18 = ssub.s32 %s12, 2
      %s25 = sadd.s32 1, %s20
      %p26 = scmp.ge.s32.totalorder %s25, 2
      %s27 = scalar_select %p26, 0, %s25
      %s28 = sadd.s32 1, %s19
      %s29 = scalar_select %p26, %s28, %s19
      %p30 = scmp.ge.s32.totalorder %s29, 2
      %s31 = scalar_select %p30, 0, %s29
      %s32 = smul.u32 %s19, 2
      %s33 = sadd.s32 %s32, %s20
      %p34 = scmp.lt.s32.totalorder %s33, 2
      %s35 = scalar_select %p34, %s33, 2
      %s36 = smul.u32 %s31, 2
      %s37 = sadd.s32 %s36, %s27
      %p38 = scmp.lt.s32.totalorder %s37, 2
      %s39 = scalar_select %p38, %s37, 2
      %s40 = ssub.s32 %s35, %s39
      %p41 = scmp.eq.s32.totalorder %s40, 0
      %s43 = sadd.s32 %s42, 1
      %s44 = scalar_select %p41, %s42, %s43
      %p47 = pneg %p41
      %p48 = scmp.eq.s32.totalorder %s12, 3
      %p49 = por %p47, %p48
      %p50 = scmp.ne.s32.totalorder %s42, %s45
      %p51 = scmp.eq.s32.totalorder %s12, 0
      %p52 = por %p50, %p51
      %p53 = scmp.ne.s32.totalorder %s42, %s45
      %p54 = scmp.eq.s32.totalorder %s17, 3
      %p55 = por %p53, %p54
      %p56 = scmp.ne.s32.totalorder %s45, %s46
      %p57 = scmp.eq.s32.totalorder %s17, 0
      %p58 = por %p56, %p57
      %p59 = scmp.ne.s32.totalorder %s45, %s46
      %p60 = scmp.eq.s32.totalorder %s18, 3
      %p61 = por %p59, %p60
      %p63 = scmp.ne.s32.totalorder %s46, %s62
      %p64 = scmp.eq.s32.totalorder %s18, 0
      %p65 = por %p63, %p64
      %s67 = sadd.s32 %s66, 1
      %p70 = scmp.eq.s32.totalorder %s12, 3
      %p71 = scmp.ne.s32.totalorder %s66, %s68
      %p72 = scmp.eq.s32.totalorder %s12, 0
      %p73 = por %p71, %p72
      %p74 = scmp.ne.s32.totalorder %s66, %s68
      %p75 = scmp.eq.s32.totalorder %s17, 3
      %p76 = por %p74, %p75
      %p77 = scmp.ne.s32.totalorder %s68, %s69
      %p78 = scmp.eq.s32.totalorder %s17, 0
      %p79 = por %p77, %p78
      %p80 = scmp.ne.s32.totalorder %s68, %s69
      %p81 = scmp.eq.s32.totalorder %s18, 3
      %p82 = por %p80, %p81
      %p84 = scmp.ne.s32.totalorder %s69, %s83
      %p85 = scmp.eq.s32.totalorder %s18, 0
      %p86 = por %p84, %p85
      %s88 = sadd.s32 %s87, 1
      %p91 = scmp.eq.s32.totalorder %s12, 3
      %p92 = scmp.ne.s32.totalorder %s87, %s89
      %p93 = scmp.eq.s32.totalorder %s12, 0
      %p94 = por %p92, %p93
      %p95 = scmp.ne.s32.totalorder %s87, %s89
      %p96 = scmp.eq.s32.totalorder %s17, 3
      %p97 = por %p95, %p96
      %p98 = scmp.ne.s32.totalorder %s89, %s90
      %p99 = scmp.eq.s32.totalorder %s17, 0
      %p100 = por %p98, %p99
      %p101 = scmp.ne.s32.totalorder %s89, %s90
      %p102 = scmp.eq.s32.totalorder %s18, 3
      %p103 = por %p101, %p102
      %p105 = scmp.ne.s32.totalorder %s90, %s104
      %p106 = scmp.eq.s32.totalorder %s18, 0
      %p107 = por %p105, %p106
      %s108 = ssub.s32 %s19, %s31
      %p109 = scmp.eq.s32.totalorder %s108, 0
      %s111 = sadd.s32 %s110, 1
      %s112 = scalar_select %p109, %s110, %s111
      %p115 = pneg %p109
      %p116 = scmp.eq.s32.totalorder %s12, 3
      %p117 = por %p115, %p116
      %p118 = scmp.ne.s32.totalorder %s110, %s113
      %p119 = scmp.eq.s32.totalorder %s12, 0
      %p120 = por %p118, %p119
      %p121 = scmp.ne.s32.totalorder %s110, %s113
      %p122 = scmp.eq.s32.totalorder %s17, 3
      %p123 = por %p121, %p122
      %p124 = scmp.ne.s32.totalorder %s113, %s114
      %p125 = scmp.eq.s32.totalorder %s17, 0
      %p126 = por %p124, %p125
      %p127 = scmp.ne.s32.totalorder %s113, %s114
      %p128 = scmp.eq.s32.totalorder %s18, 3
      %p129 = por %p127, %p128
      %p131 = scmp.ne.s32.totalorder %s114, %s130
      %p132 = scmp.eq.s32.totalorder %s18, 0
      %p133 = por %p131, %p132
      %p134 = scmp.le.s32.totalorder 1, %s12
      %p135 = scmp.lt.s32.totalorder %s12, 5
      %p136 = pnand %p134, %p135
      %p137 = pneg %p136
      // Predicated region
      $region9: #{tpu_custom_call.1} parent=5 // pred_check
        _
      $region10: #{tpu_custom_call.1} parent=5 // pred_check_branch
        %139 = sbr.rel (%p136) target = $region12
      $region11: #{tpu_custom_call.1} parent=5 // pred_region
        %s140 = ssub.s32 %s12, 1
        // Predicated region
        $region13: #{tpu_custom_call.1} parent=11 // pred_check
          %p141 = pneg %p79
        $region14: #{tpu_custom_call.1} parent=11 // pred_check_branch
          %143 = sbr.rel (%p141) target = $region16
        $region15: #{tpu_custom_call.1} parent=11 // pred_region
          _
        $region16: #{tpu_custom_call.1} parent=11 // pred_fallthru
          _
        // Predicated region
        $region17: #{tpu_custom_call.1} parent=11 // pred_check
          %p144 = pneg %p100
        $region18: #{tpu_custom_call.1} parent=11 // pred_check_branch
          %146 = sbr.rel (%p144) target = $region20
        $region19: #{tpu_custom_call.1} parent=11 // pred_region
          _
        $region20: #{tpu_custom_call.1} parent=11 // pred_fallthru
          _
      $region12: #{tpu_custom_call.1} parent=5 // pred_fallthru
        _
      %p147 = scmp.lt.s32.totalorder %s12, 4
      // Predicated region
      $region21: #{tpu_custom_call.1} parent=5 // pred_check
        %p148 = pneg %p147
      $region22: #{tpu_custom_call.1} parent=5 // pred_check_branch
        %150 = sbr.rel (%p148) target = $region24
      $region23: #{tpu_custom_call.1} parent=5 // pred_region
        // Predicated region
        $region25: #{tpu_custom_call.1} parent=23 // pred_check
          %p151 = pneg %p52
        $region26: #{tpu_custom_call.1} parent=23 // pred_check_branch
          %153 = sbr.rel (%p151) target = $region28
        $region27: #{tpu_custom_call.1} parent=23 // pred_region
          %s154 = smul.u32 %s19, 2
          %s155 = sadd.s32 %s154, %s20
          %p156 = scmp.lt.s32.totalorder %s155, 2
          %s157 = scalar_select %p156, %s155, 2
          %s158 = smul.u32 16, %s157
          %s159 = ssub.s32 38, %s158
          %p160 = scmp.lt.s32.totalorder %s159, 16
          %s161 = scalar_select %p160, %s159, 16
          %s162 = smul.u32 8, %s161
          %p163 = scmp.lt.s32.totalorder %s158, 37
          %s164 = scalar_select %p163, %s158, 37
          %s165 = smul.addr %s164, 8
          %s166 = scalar_lea.vmem %s0, %s165
          %s167 = smul.u32 %s19, 2
          %s168 = sadd.s32 %s167, %s20
          %p169 = scmp.lt.s32.totalorder %s168, 2
          %s170 = scalar_select %p169, %s168, 2
          %s171 = smul.u32 16, %s170
          %s172 = ssub.s32 38, %s171
          %p173 = scmp.lt.s32.totalorder %s172, 16
          %s174 = scalar_select %p173, %s172, 16
          %s175 = smul.u32 8, %s174
        $region28: #{tpu_custom_call.1} parent=23 // pred_fallthru
          _
      $region24: #{tpu_custom_call.1} parent=5 // pred_fallthru
        _
      %p176 = scmp.le.s32.totalorder 1, %s12
      %p177 = scmp.lt.s32.totalorder %s12, 5
      %p178 = pnand %p176, %p177
      %p179 = pneg %p178
      // Predicated region
      $region29: #{tpu_custom_call.1} parent=5 // pred_check
        _
      $region30: #{tpu_custom_call.1} parent=5 // pred_check_branch
        %181 = sbr.rel (%p178) target = $region32
      $region31: #{tpu_custom_call.1} parent=5 // pred_region
        %s182 = ssub.s32 %s12, 1
        %s183 = smul.u32 %s21, 2
        %s184 = sadd.s32 %s183, %s22
        %p185 = scmp.lt.s32.totalorder %s184, 2
        %s186 = scalar_select %p185, %s184, 2
        %s187 = smul.u32 16, %s186
        %s188 = ssub.s32 38, %s187
        %p189 = scmp.lt.s32.totalorder %s188, 16
        %s190 = scalar_select %p189, %s188, 16
        %s191 = smul.u32 8, %s190
        %p192 = scmp.lt.s32.totalorder %s187, 37
        %s193 = scalar_select %p192, %s187, 37
        %s194 = smul.addr %s193, 8
        %s195 = scalar_lea.vmem %s0, %s194
        %p196 = pneg %p58
        %p197 = pneg %p55
        %p198 = pneg %p79
        %p199 = pneg %p76
        %p200 = pneg %p100
        %p201 = pneg %p97
        %p202 = pneg %p126
        %p203 = pneg %p123
        %s204 = sand.u32 %s113, 1
        %s205 = scalar_lea.sflag [#allocation4], %s204
        %s206 = sand.u32 %s113, 1
        %s207 = smul.addr %s206, 8
        %s208 = scalar_lea.vmem [#allocation3], %s207
        %s209 = smul.u32 %s21, 2
        %s210 = sadd.s32 %s209, %s22
        %p211 = scmp.lt.s32.totalorder %s210, 2
        %s212 = scalar_select %p211, %s210, 2
        %s213 = smul.u32 16, %s212
        %s214 = ssub.s32 38, %s213
        %p215 = scmp.lt.s32.totalorder %s214, 16
        %s216 = scalar_select %p215, %s214, 16
        %s217 = smul.u32 8, %s216
        %p218 = scmp.lt.s32.totalorder %s213, 37
        %s219 = scalar_select %p218, %s213, 37
        %s220 = smul.addr %s219, 8
        %s221 = scalar_lea.vmem %s0, %s220
        %s222 = smul.u32 %s21, 2
        %s223 = sadd.s32 %s222, %s22
        %p224 = scmp.lt.s32.totalorder %s223, 2
        %s225 = scalar_select %p224, %s223, 2
        %s226 = smul.u32 16, %s225
        %s227 = ssub.s32 38, %s226
        %p228 = scmp.lt.s32.totalorder %s227, 16
        %s229 = scalar_select %p228, %s227, 16
        %s230 = smul.u32 8, %s229
        %p231 = scmp.eq.s32.totalorder %s22, 0
        // Predicated region
        $region33: #{tpu_custom_call.1} parent=31 // pred_check
          %p232 = pneg %p231
        $region34: #{tpu_custom_call.1} parent=31 // pred_check_branch
          %234 = sbr.rel (%p232) target = $region36
        $region35: #{tpu_custom_call.1} parent=31 // pred_region
          %vm235 = vcmask 130048
          %236 = vst.msk [vmem:[#allocation2] sm:$0xff] %vm235, 0.0
          %237 = vst.msk [vmem:[#allocation2 + $0x8] sm:$0xff] %vm235, 0.0
        $region36: #{tpu_custom_call.1} parent=31 // pred_fallthru
          _
        %v238 = vld [vmem:[%s221] sm:$0xff]
        %v239 = vld [vmem:[%s221 + $0x8] sm:$0xff]
        %v240 = vld [vmem:[%s221 + $0x10] sm:$0xff]
        %v241 = vld [vmem:[%s221 + $0x18] sm:$0xff]
        %v242 = vld [vmem:[%s221 + $0x20] sm:$0xff]
        %v243 = vld [vmem:[%s221 + $0x28] sm:$0xff]
        %v244 = vld [vmem:[%s221 + $0x30] sm:$0xff]
        %v245 = vld [vmem:[%s221 + $0x38] sm:$0xff]
        %v246 = vld [vmem:[%s221 + $0x40] sm:$0xff]
        %v247 = vld [vmem:[%s221 + $0x48] sm:$0xff]
        %v248 = vld [vmem:[%s221 + $0x50] sm:$0xff]
        %v249 = vld [vmem:[%s221 + $0x58] sm:$0xff]
        %v250 = vld [vmem:[%s221 + $0x60] sm:$0xff]
        %v251 = vld [vmem:[%s221 + $0x68] sm:$0xff]
        %v252 = vld [vmem:[%s221 + $0x70] sm:$0xff]
        %v253 = vld [vmem:[%s221 + $0x78] sm:$0xff]
        %v254 = vld [vmem:[%s1] sm:$0x1]
        %v256 = vperm.slane %v254, 0
        %v258 = vsub.f32 %v238, %v256
        %v259 = vsub.f32 %v239, %v256
        %v260 = vsub.f32 %v240, %v256
        %v261 = vsub.f32 %v241, %v256
        %v262 = vsub.f32 %v242, %v256
        %v263 = vsub.f32 %v243, %v256
        %v264 = vsub.f32 %v244, %v256
        %v265 = vsub.f32 %v245, %v256
        %v266 = vsub.f32 %v246, %v256
        %v267 = vsub.f32 %v247, %v256
        %v268 = vsub.f32 %v248, %v256
        %v269 = vsub.f32 %v249, %v256
        %v270 = vsub.f32 %v250, %v256
        %v271 = vsub.f32 %v251, %v256
        %v272 = vsub.f32 %v252, %v256
        %v273 = vsub.f32 %v253, %v256
        %s274 = smul.u32 %s21, 2
        %s275 = sadd.s32 %s274, %s22
        %s276 = smul.u32 %s275, 128
        %v277 = vlaneseq
        %v278 = vshrl.u32 %v277, 7
        %v279 = vadd.s32 %v278, 8
        %v280 = vadd.s32 %v278, 16
        %v281 = vadd.s32 %v278, 24
        %v282 = vadd.s32 %v278, 32
        %v283 = vadd.s32 %v278, 40
        %v284 = vadd.s32 %v278, 48
        %v285 = vadd.s32 %v278, 56
        %v286 = vadd.s32 %v278, 64
        %v287 = vadd.s32 %v278, 72
        %v288 = vadd.s32 %v278, 80
        %v289 = vadd.s32 %v278, 88
        %v290 = vadd.s32 %v278, 96
        %v291 = vadd.s32 %v278, 104
        %v292 = vadd.s32 %v278, 112
        %v293 = vadd.s32 %v278, 120
        %v294 = vstv %s276
        %v295 = vadd.s32 %v278, %v294
        %v296 = vadd.s32 %v279, %v294
        %v297 = vadd.s32 %v280, %v294
        %v298 = vadd.s32 %v281, %v294
        %v299 = vadd.s32 %v282, %v294
        %v300 = vadd.s32 %v283, %v294
        %v301 = vadd.s32 %v284, %v294
        %v302 = vadd.s32 %v285, %v294
        %v303 = vadd.s32 %v286, %v294
        %v304 = vadd.s32 %v287, %v294
        %v305 = vadd.s32 %v288, %v294
        %v306 = vadd.s32 %v289, %v294
        %v307 = vadd.s32 %v290, %v294
        %v308 = vadd.s32 %v291, %v294
        %v309 = vadd.s32 %v292, %v294
        %v310 = vadd.s32 %v293, %v294
        %vm311 = vcmp.lt.s32.totalorder %v295, 300
        %vm312 = vcmp.lt.s32.totalorder %v296, 300
        %vm313 = vcmp.lt.s32.totalorder %v297, 300
        %vm314 = vcmp.lt.s32.totalorder %v298, 300
        %vm315 = vcmp.lt.s32.totalorder %v299, 300
        %vm316 = vcmp.lt.s32.totalorder %v300, 300
        %vm317 = vcmp.lt.s32.totalorder %v301, 300
        %vm318 = vcmp.lt.s32.totalorder %v302, 300
        %vm319 = vcmp.lt.s32.totalorder %v303, 300
        %vm320 = vcmp.lt.s32.totalorder %v304, 300
        %vm321 = vcmp.lt.s32.totalorder %v305, 300
        %vm322 = vcmp.lt.s32.totalorder %v306, 300
        %vm323 = vcmp.lt.s32.totalorder %v307, 300
        %vm324 = vcmp.lt.s32.totalorder %v308, 300
        %vm325 = vcmp.lt.s32.totalorder %v309, 300
        %vm326 = vcmp.lt.s32.totalorder %v310, 300
        %v327 = vsel %vm311, 1, 0
        %v328 = vsel %vm312, 1, 0
        %v329 = vsel %vm313, 1, 0
        %v330 = vsel %vm314, 1, 0
        %v331 = vsel %vm315, 1, 0
        %v332 = vsel %vm316, 1, 0
        %v333 = vsel %vm317, 1, 0
        %v334 = vsel %vm318, 1, 0
        %v335 = vsel %vm319, 1, 0
        %v336 = vsel %vm320, 1, 0
        %v337 = vsel %vm321, 1, 0
        %v338 = vsel %vm322, 1, 0
        %v339 = vsel %vm323, 1, 0
        %v340 = vsel %vm324, 1, 0
        %v341 = vsel %vm325, 1, 0
        %v342 = vsel %vm326, 1, 0
        %vm343 = vcmp.eq.s32.totalorder %v327, 1
        %vm344 = vcmp.eq.s32.totalorder %v328, 1
        %vm345 = vcmp.eq.s32.totalorder %v329, 1
        %vm346 = vcmp.eq.s32.totalorder %v330, 1
        %vm347 = vcmp.eq.s32.totalorder %v331, 1
        %vm348 = vcmp.eq.s32.totalorder %v332, 1
        %vm349 = vcmp.eq.s32.totalorder %v333, 1
        %vm350 = vcmp.eq.s32.totalorder %v334, 1
        %vm351 = vcmp.eq.s32.totalorder %v335, 1
        %vm352 = vcmp.eq.s32.totalorder %v336, 1
        %vm353 = vcmp.eq.s32.totalorder %v337, 1
        %vm354 = vcmp.eq.s32.totalorder %v338, 1
        %vm355 = vcmp.eq.s32.totalorder %v339, 1
        %vm356 = vcmp.eq.s32.totalorder %v340, 1
        %vm357 = vcmp.eq.s32.totalorder %v341, 1
        %vm358 = vcmp.eq.s32.totalorder %v342, 1
        %v359 = vsel %vm343, %v258, 0.0
        %v360 = vsel %vm344, %v259, 0.0
        %v361 = vsel %vm345, %v260, 0.0
        %v362 = vsel %vm346, %v261, 0.0
        %v363 = vsel %vm347, %v262, 0.0
        %v364 = vsel %vm348, %v263, 0.0
        %v365 = vsel %vm349, %v264, 0.0
        %v366 = vsel %vm350, %v265, 0.0
        %v367 = vsel %vm351, %v266, 0.0
        %v368 = vsel %vm352, %v267, 0.0
        %v369 = vsel %vm353, %v268, 0.0
        %v370 = vsel %vm354, %v269, 0.0
        %v371 = vsel %vm355, %v270, 0.0
        %v372 = vsel %vm356, %v271, 0.0
        %v373 = vsel %vm357, %v272, 0.0
        %v374 = vsel %vm358, %v273, 0.0
        %v375 = vld [vmem:[#allocation2] sm:$0xff]
        %v376 = vld [vmem:[#allocation2 + $0x8] sm:$0xff]
        %377 = vxpose.xlu0.b32.start [1/16] %v359, 128
        %378 = vxpose.xlu0.b32.cont [2/16] %v360, 128
        %379 = vxpose.xlu0.b32.cont [3/16] %v361, 128
        %380 = vxpose.xlu0.b32.cont [4/16] %v362, 128
        %381 = vxpose.xlu0.b32.cont [5/16] %v363, 128
        %382 = vxpose.xlu0.b32.cont [6/16] %v364, 128
        %383 = vxpose.xlu0.b32.cont [7/16] %v365, 128
        %384 = vxpose.xlu0.b32.cont [8/16] %v366, 128
        %385 = vxpose.xlu0.b32.cont [9/16] %v367, 128
        %386 = vxpose.xlu0.b32.cont [10/16] %v368, 128
        %387 = vxpose.xlu0.b32.cont [11/16] %v369, 128
        %388 = vxpose.xlu0.b32.cont [12/16] %v370, 128
        %389 = vxpose.xlu0.b32.cont [13/16] %v371, 128
        %390 = vxpose.xlu0.b32.cont [14/16] %v372, 128
        %391 = vxpose.xlu0.b32.cont [15/16] %v373, 128
        %392 = vxpose.xlu0.b32.end [16/16] %v374, 128
        %v393 = vpop.trf.xlu0
        %v394 = vpop.trf.xlu0
        %v395 = vpop.trf.xlu0
        %v396 = vpop.trf.xlu0
        %v397 = vpop.trf.xlu0
        %v398 = vpop.trf.xlu0
        %v399 = vpop.trf.xlu0
        %v400 = vpop.trf.xlu0
        %v401 = vpop.trf.xlu0
        %v402 = vpop.trf.xlu0
        %v403 = vpop.trf.xlu0
        %v404 = vpop.trf.xlu0
        %v405 = vpop.trf.xlu0
        %v406 = vpop.trf.xlu0
        %v407 = vpop.trf.xlu0
        %v408 = vpop.trf.xlu0
        %409 = vmatpush.msra.mxu0 %v374
        %410 = vmatpush.msra.mxu0 %v373
        %411 = vmatpush.msra.mxu0 %v372
        %412 = vmatpush.msra.mxu0 %v371
        %413 = vmatpush.msra.mxu0 %v370
        %414 = vmatpush.msra.mxu0 %v369
        %415 = vmatpush.msra.mxu0 %v368
        %416 = vmatpush.msra.mxu0 %v367
        %417 = vmatpush.msra.mxu0 %v366
        %418 = vmatpush.msra.mxu0 %v365
        %419 = vmatpush.msra.mxu0 %v364
        %420 = vmatpush.msra.mxu0 %v363
        %421 = vmatpush.msra.mxu0 %v362
        %422 = vmatpush.msra.mxu0 %v361
        %423 = vmatpush.msra.mxu0 %v360
        %424 = vmatpush.msra.mxu0 %v359
        %425 = vmatmul.f32.gmra.mxu0 %v393
        %v426 = vpop.f32.mrf.mxu0
        %v427 = vadd.f32 0.0, %v426
        %428 = vmatmul.f32.gmra.mxu0 %v394
        %v429 = vpop.f32.mrf.mxu0
        %v430 = vadd.f32 0.0, %v429
        %431 = vdwg.mxu0
        %v432 = vadd.f32 %v375, %v427
        %v433 = vadd.f32 %v376, %v430
        %vm434 = vcmask 130048
        %435 = vst.msk [vmem:[#allocation2] sm:$0xff] %vm434, %v432
        %436 = vst.msk [vmem:[#allocation2 + $0x8] sm:$0xff] %vm434, %v433
        %p437 = scmp.eq.s32.totalorder %s22, 1
        // Predicated region
        $region37: #{tpu_custom_call.1} parent=31 // pred_check
          %p438 = pneg %p437
        $region38: #{tpu_custom_call.1} parent=31 // pred_check_branch
          %440 = sbr.rel (%p438) target = $region40
        $region39: #{tpu_custom_call.1} parent=31 // pred_region
          %v441 = vld [vmem:[%s2] sm:$0xff]
          %v442 = vld [vmem:[%s2 + $0x8] sm:$0xff]
          %v443 = vld [vmem:[#allocation2] sm:$0xff]
          %v444 = vld [vmem:[#allocation2 + $0x8] sm:$0xff]
          %v445 = vmul.f32 %v441, %v443
          %v446 = vmul.f32 %v442, %v444
          %v447 = vsel %vm434, %v445, 0.0
          %v448 = vsel %vm434, %v446, 0.0
          %v449 = vadd.f32 %v447, %v448
          %450 = vadd.xlane.f32.xlu0 %v449
          %v451 = vpop.xlane.xlu0 %450
          %v452 = vrot.slane %v451, 4
          %v453 = vadd.f32 %v451, %v452
          %v454 = vrot.slane %v453, 2
          %v455 = vadd.f32 %v453, %v454
          %v456 = vrot.slane %v455, 1
          %v457 = vadd.f32 %v455, %v456
          %s458 = vtos %v457
          %v459 = vstv %s458
          %460 = vst [vmem:[%s208] sm:$0xff] %v459
        $region40: #{tpu_custom_call.1} parent=31 // pred_fallthru
          _
        %s461 = sand.u32 %s113, 1
        %s462 = scalar_lea.sflag [#allocation4], %s461
        %s463 = sand.u32 %s113, 1
        %s464 = smul.addr %s463, 8
        %s465 = scalar_lea.vmem [#allocation3], %s464
        // Predicated region
        $region41: #{tpu_custom_call.1} parent=31 // pred_check
          %p466 = pneg %p123
        $region42: #{tpu_custom_call.1} parent=31 // pred_check_branch
          %468 = sbr.rel (%p466) target = $region44
        $region43: #{tpu_custom_call.1} parent=31 // pred_region
          %470 = vsyncadd %s462, 0
          %s471 = smul.addr %s21, 8
          %s472 = scalar_lea.hbm %s3, %s471
          %s474 = sshll.u32 %s465, 4
          %s475 = int_to_ptr.vmem [resolvable:$true] %s474
          %s476 = sshll.u32 %s472, 4
          %s477 = int_to_ptr.hbm [resolvable:$true] %s476
          %479 = dma.vmem_to_hbm [thread:$0]  %s475, 128, %s477, %s462
        $region44: #{tpu_custom_call.1} parent=31 // pred_fallthru
          _
      $region32: #{tpu_custom_call.1} parent=5 // pred_fallthru
        _
      %p480 = scmp.le.s32.totalorder 2, %s12
      // Predicated region
      $region45: #{tpu_custom_call.1} parent=5 // pred_check
        %p481 = pneg %p480
      $region46: #{tpu_custom_call.1} parent=5 // pred_check_branch
        %483 = sbr.rel (%p481) target = $region48
      $region47: #{tpu_custom_call.1} parent=5 // pred_region
        %s484 = ssub.s32 %s12, 2
        // Predicated region
        $region49: #{tpu_custom_call.1} parent=47 // pred_check
          %p485 = pneg %p129
        $region50: #{tpu_custom_call.1} parent=47 // pred_check_branch
          %487 = sbr.rel (%p485) target = $region52
        $region51: #{tpu_custom_call.1} parent=47 // pred_region
          %s488 = sand.u32 %s114, 1
          %s489 = scalar_lea.sflag [#allocation4], %s488
          %s490 = sand.u32 %s114, 1
          %s491 = smul.addr %s490, 8
          %s492 = scalar_lea.vmem [#allocation3], %s491
          %494 = dma.done %s489, 128
        $region52: #{tpu_custom_call.1} parent=47 // pred_fallthru
          _
      $region48: #{tpu_custom_call.1} parent=5 // pred_fallthru
        _
    $region6: #{tpu_custom_call.1} parent=1 // loop_footer
      %s16 = sadd.s32 1, %s12
    $region7: #{tpu_custom_call.1} parent=1 // loop_footer_branch
      %11 = sbr.rel target = $region3
    $region8: #{tpu_custom_call.1} parent=1 // loop_exit
      _
    %495 = vsyncpa [#allocation4], 1
    %s496 = scalar_lea.sflag [#allocation4], 1
    %497 = vsyncpa %s496, 1

</llo_original>
